<compile_context>
chip_gen: v5e
topology: v5e:2x2
jax: 0.10.0
libtpu: 0.0.40
codegen_flags: <defaults>
</compile_context>

<pallas_src>
import functools
import math

import numpy as np
import jax
import jax.numpy as jnp
from jax.experimental import pallas as pl
from jax.experimental.pallas import tpu as pltpu


def _round_up(x, m):
    return ((x + m - 1) // m) * m


def _gat_kernel(lo_ref, nb_ref,             # scalar prefetch (SMEM): per-N-tile edge-block lo / count
                slab_ref, dst_ref, sel_ref,  # VMEM inputs
                out_ref,                     # VMEM output block (doubles as f32 accumulator)
                *, n_head, f_out, tn, matmul_dtype):
    # slab_ref : (TE, PAD)   per-edge slab [ (h*w_i - r)_i | ones(H) | logits(H) | 0 ]
    # dst_ref  : (1, TE)     destination node index per edge (sorted by dst)
    # sel_ref  : (H, PAD)    selector: row i has 1s on head-i feature cols and col nf+i
    # out_ref  : (TN, PAD)   resident accumulator / packed output
    n = pl.program_id(0)
    k = pl.program_id(1)
    nf = n_head * f_out

    @pl.when(k == 0)
    def _init():
        out_ref[...] = jnp.zeros_like(out_ref)

    @pl.when(k < nb_ref[n])
    def _accumulate():
        slab = slab_ref[...]                                   # (TE, PAD)
        te = slab.shape[0]
        logits = slab[:, nf + n_head:nf + 2 * n_head]          # (TE, H)
        lrelu = jnp.where(logits > 0, logits, 0.2 * logits)    # LeakyReLU(0.2)
        e = jnp.exp(-lrelu)                                    # (TE, H)   (EUP)
        # TODO(synk): attn_dropout skipped (module evaluated with training=False)

        # Expand e over each head's feature columns + its rowsum column with a tiny
        # selector matmul (no lane-misaligned concatenates), then one VPU multiply.
        e_exp = jnp.dot(e, sel_ref[...], preferred_element_type=jnp.float32)   # (TE, PAD)
        vals = slab * e_exp   # head-i cols: (h*w_i - r)*e_i ; col nf+i: e_i ; rest: 0

        # 0/1 scatter tile built in-kernel from dst indices — no HBM scatter matrix.
        node_ids = jax.lax.broadcasted_iota(jnp.int32, (tn, te), 0) + n * tn
        scat = (node_ids == dst_ref[...]).astype(matmul_dtype)                 # (TN, TE)
        out_ref[...] += jnp.dot(scat, vals.astype(matmul_dtype),
                                preferred_element_type=jnp.float32)

    @pl.when(k == pl.num_programs(1) - 1)
    def _finalize():
        acc = out_ref[...]                                     # (TN, PAD)
        rowsum = acc[:, nf:nf + n_head]                        # (TN, H)
        # NOTE: nodes with no incoming edge (and padded rows) have rowsum==0 ->
        # inf/NaN, matching the PyTorch dense-divide semantics; pad rows are
        # sliced off in the wrapper.
        inv = pl.reciprocal(rowsum, approx=False)              # (TN, H)
        inv_exp = jnp.dot(inv, sel_ref[...], preferred_element_type=jnp.float32)
        out_ref[...] = acc * inv_exp                           # head cols normalized


def rmhga2b_forward(h, inputr, A, w, a_src_dst, n_head, *,
                    matmul_dtype=jnp.float32, te_max=2048, tn_max=1024):
    """Pallas forward. Returns (output (n_head, N, F), inputr)."""
    N, F = h.shape
    E = A.shape[1]
    nf = n_head * F
    pad_w = _round_up(nf + 2 * n_head, 128)                    # lane-dense slab width

    dst = A[0].astype(jnp.int32)
    rel = A[1].astype(jnp.int32)
    src = A[2].astype(jnp.int32)

    # ---- sort edges by destination so each N tile owns a contiguous edge range ----
    order = jnp.argsort(dst)
    dst_s, rel_s, src_s = dst[order], rel[order], src[order]

    # ---- plain-JAX glue (gathers + layout plumbing into one lane-dense edge slab) ----
    h_src = h[src_s].astype(jnp.float32)                        # (E, F)
    r_edge = inputr[rel_s].astype(jnp.float32)                  # (E, F)

    w_flat = w[:, 0, :].astype(jnp.float32)                     # (H-1, F)
    w_cum = jnp.concatenate(
        [jnp.ones((1, F), jnp.float32), jnp.cumprod(w_flat, axis=0)], axis=0)  # (H, F)

    a_src = a_src_dst[:, 0, :, 0].astype(jnp.float32)           # (H, F)
    a_dst = a_src_dst[:, 1, :, 0].astype(jnp.float32)           # (H, F)
    # logit_i(edge) = h[src] . (w_cum_i * a_src_i) + inputr[rel] . a_dst_i
    logits = h_src @ (w_cum * a_src).T + r_edge @ a_dst.T       # (E, H)

    # per-head numerator base (Rmode == ''): h[src]*w_cum_i - inputr[rel]
    base = (h_src[:, None, :] * w_cum[None, :, :] - r_edge[:, None, :]).reshape(E, nf)
    slab = jnp.concatenate(
        [base,
         jnp.ones((E, n_head), jnp.float32),                    # rowsum "ones" columns
         logits,                                                # attention logits
         jnp.zeros((E, pad_w - nf - 2 * n_head), jnp.float32)], axis=-1)   # (E, PAD)

    # ---- tiling ----
    te = min(te_max, _round_up(E, 128))
    e_pad = _round_up(E, te)
    nb_total = e_pad // te
    # pick tn so that there are >=2 N tiles when possible (feeds both v7x TCs)
    tn = min(tn_max, max(8, _round_up(-(-N // 2), 8)))
    n_pad = _round_up(N, tn)
    n_tiles = n_pad // tn

    slab_p = jnp.pad(slab, ((0, e_pad - E), (0, 0)))
    # padded edges get dst = n_pad (never matches any node id) -> zero contribution
    dst_p = jnp.pad(dst_s, (0, e_pad - E), constant_values=n_pad).reshape(1, e_pad)

    # ---- block-sparse E iteration: per-N-tile edge-block range (scalar prefetch) ----
    bounds = jnp.arange(n_tiles + 1, dtype=jnp.int32) * tn
    starts = jnp.searchsorted(dst_s, bounds[:-1], side='left').astype(jnp.int32)
    ends = jnp.searchsorted(dst_s, bounds[1:], side='left').astype(jnp.int32)
    block_lo = jnp.clip(starts // te, 0, nb_total - 1).astype(jnp.int32)
    block_hi = jnp.clip((ends + te - 1) // te, 1, nb_total).astype(jnp.int32)
    num_blocks = jnp.maximum(block_hi - block_lo, 1).astype(jnp.int32)
    # static grid extent (host sync; this entry point is not meant to be jitted as-is)
    max_blocks = int(jax.device_get(jnp.max(num_blocks)))

    # selector: sel[i, i*F:(i+1)*F] = 1 and sel[i, nf+i] = 1 (zeros on logits/pad cols)
    sel_np = np.zeros((n_head, pad_w), np.float32)
    for i in range(n_head):
        sel_np[i, i * F:(i + 1) * F] = 1.0
        sel_np[i, nf + i] = 1.0
    sel = jnp.asarray(sel_np)

    def eslab_map(n, k, lo, nb):
        # clamp the tail so repeated indices skip the re-DMA; pl.when skips the compute
        return (lo[n] + jnp.minimum(k, nb[n] - 1), 0)

    def dst_map(n, k, lo, nb):
        return (0, lo[n] + jnp.minimum(k, nb[n] - 1))

    kernel = functools.partial(_gat_kernel, n_head=n_head, f_out=F, tn=tn,
                               matmul_dtype=matmul_dtype)

    # VMEM budget from actual buffers (double-buffered streams + resident out block),
    # with headroom, capped at 48 MiB so it is also safe on v7x's 64 MiB VMEM.
    est = 2 * (te * pad_w * 4 + te * 4) + 2 * tn * pad_w * 4 + n_head * pad_w * 4
    vmem_limit = int(min(max(4 * est, 32 * 1024 * 1024), 48 * 1024 * 1024))

    grid_spec = pltpu.PrefetchScalarGridSpec(
        num_scalar_prefetch=2,
        grid=(n_tiles, max_blocks),
        in_specs=[
            pl.BlockSpec((te, pad_w), eslab_map),                          # edge slab
            pl.BlockSpec((1, te), dst_map),                                # dst indices
            pl.BlockSpec((n_head, pad_w), lambda n, k, lo, nb: (0, 0)),    # selector
        ],
        out_specs=pl.BlockSpec((tn, pad_w), lambda n, k, lo, nb: (n, 0)),
    )

    out_packed = pl.pallas_call(
        kernel,
        out_shape=jax.ShapeDtypeStruct((n_pad, pad_w), jnp.float32),
        grid_spec=grid_spec,
        compiler_params=pltpu.CompilerParams(
            dimension_semantics=("parallel", "arbitrary"),
            vmem_limit_bytes=vmem_limit),
    )(block_lo, num_blocks, slab_p, dst_p, sel)

    out = out_packed[:N, :nf].reshape(N, n_head, F).transpose(1, 0, 2)
    return out, inputr


def rmhga2b_ref(h, inputr, A, w, a_src_dst, n_head):
    """Pure-JAX reference mirroring the PyTorch forward (eval mode)."""
    dst, rel, src = A[0], A[1], A[2]
    N, F = h.shape
    outs = []
    hh = h
    for i in range(n_head):
        if i >= 1:
            hh = hh * w[i - 1]
        logit = hh[src] @ a_src_dst[i, 0] + inputr[rel] @ a_src_dst[i, 1]  # (E,1)
        lrelu = jnp.where(logit > 0, logit, 0.2 * logit)
        e = jnp.exp(-lrelu)[:, 0]                                          # (E,)
        e_rowsum = jnp.zeros((N,), jnp.float32).at[dst].add(e)[:, None]
        edge_h = (hh[src] - inputr[rel]) * e[:, None]
        h_prime = jnp.zeros((N, F), jnp.float32).at[dst].add(edge_h)
        outs.append((h_prime / e_rowsum)[None])
    return jnp.concatenate(outs, axis=0)


if __name__ == "__main__":
    n_head, f_out = 2, 32
    N_nodes, E, R = 16, 64, 8

    key = jax.random.PRNGKey(0)
    k1, k2, k3, k4, k5, k6, k7 = jax.random.split(key, 7)

    h = jax.random.normal(k1, (N_nodes, f_out), dtype=jnp.float32)
    inputr = jax.random.normal(k2, (R, f_out), dtype=jnp.float32)

    # edges: every node gets at least one incoming edge (matches the dense-divide
    # semantics of the original module without producing NaNs)
    dst = jnp.concatenate([jnp.arange(N_nodes, dtype=jnp.int32),
                           jax.random.randint(k3, (E - N_nodes,), 0, N_nodes, jnp.int32)])
    rel = jax.random.randint(k4, (E,), 0, R, jnp.int32)
    src = jax.random.randint(k5, (E,), 0, N_nodes, jnp.int32)
    A = jnp.stack([dst, rel, src], axis=0)

    # parameters (deterministic synthetic init, shapes from __init__ with diag=True)
    w = 1.0 + 0.1 * jax.random.normal(k6, (n_head - 1, 1, f_out), dtype=jnp.float32)
    stdv = 1.0 / math.sqrt(2 * f_out)
    a_src_dst = stdv * jax.random.normal(k7, (n_head, 2, f_out, 1), dtype=jnp.float32)

    out, inputr_out = rmhga2b_forward(h, inputr, A, w, a_src_dst, n_head)
    out = jax.block_until_ready(out)

    ref = rmhga2b_ref(h, inputr, A, w, a_src_dst, n_head)
    assert out.shape == (n_head, N_nodes, f_out)
    assert jnp.allclose(out, ref, rtol=1e-4, atol=1e-4), "mismatch vs reference"

    print("KERNEL_OK")
</pallas_src>

<mosaic_0001>
module attributes {stable_mosaic.version = 11 : i64} {
  func.func @_gat_kernel(%arg0: i32, %arg1: i32, %arg2: memref<2xi32, #tpu.memory_space<smem>>, %arg3: memref<2xi32, #tpu.memory_space<smem>>, %arg4: memref<128x128xf32, #tpu.memory_space<vmem>>, %arg5: memref<1x128xi32, #tpu.memory_space<vmem>>, %arg6: memref<2x128xf32, #tpu.memory_space<vmem>>, %arg7: memref<8x128xf32, #tpu.memory_space<vmem>>) attributes {dimension_semantics = [#tpu.dimension_semantics<parallel>, #tpu.dimension_semantics<arbitrary>], iteration_bounds = array<i64: 2, 1>, scalar_prefetch = 2 : i64, scratch_operands = 0 : i64, tpu.core_type = #tpu.core_type<tc>, window_params = [{transform_indices = @transform_0, window_bounds = array<i64: 128, 128>}, {transform_indices = @transform_1, window_bounds = array<i64: 1, 128>}, {pipeline_mode = #tpu.pipeline_mode<synchronous>, transform_indices = @transform_2, window_bounds = array<i64: 2, 128>}, {transform_indices = @transform_3, window_bounds = array<i64: 8, 128>}]} {
    %c0_i32 = arith.constant 0 : i32
    %0 = arith.cmpi eq, %arg1, %c0_i32 : i32
    %1 = arith.extui %0 : i1 to i32
    %c0_i32_0 = arith.constant 0 : i32
    %2 = arith.cmpi ne, %1, %c0_i32_0 : i32
    scf.if %2 {
      %cst = arith.constant 0.000000e+00 : f32
      %11 = vector.broadcast %cst : f32 to vector<8x128xf32>
      %c0 = arith.constant 0 : index
      %c0_4 = arith.constant 0 : index
      %12 = vector.load %arg7[%c0, %c0_4] : memref<8x128xf32, #tpu.memory_space<vmem>>, vector<8x128xf32>
      tpu.vector_store %arg7[%c0, %c0_4], %11 {strides = array<i32>} : memref<8x128xf32, #tpu.memory_space<vmem>>, vector<8x128xf32>,
    } else {
    }
    %3 = arith.index_cast %arg0 : i32 to index
    %4 = memref.load %arg3[%3] : memref<2xi32, #tpu.memory_space<smem>>
    %5 = arith.cmpi slt, %arg1, %4 : i32
    %6 = arith.extui %5 : i1 to i32
    %c0_i32_1 = arith.constant 0 : i32
    %7 = arith.cmpi ne, %6, %c0_i32_1 : i32
    scf.if %7 {
      %c0 = arith.constant 0 : index
      %c0_4 = arith.constant 0 : index
      %11 = vector.load %arg4[%c0, %c0_4] : memref<128x128xf32, #tpu.memory_space<vmem>>, vector<128x128xf32>
      %12 = vector.extract_strided_slice %11 {offsets = [0, 66], sizes = [128, 2], strides = [1, 1]} : vector<128x128xf32> to vector<128x2xf32>
      %cst = arith.constant 0.000000e+00 : f32
      %13 = vector.broadcast %cst : f32 to vector<128x2xf32>
      %14 = arith.cmpf ogt, %12, %13 : vector<128x2xf32>
      %cst_5 = arith.constant 2.000000e-01 : f32
      %15 = vector.broadcast %cst_5 : f32 to vector<128x2xf32>
      %16 = arith.mulf %15, %12 : vector<128x2xf32>
      %17 = arith.select %14, %12, %16 : vector<128x2xi1>, vector<128x2xf32>
      %cst_6 = arith.constant 0.000000e+00 : f32
      %18 = vector.broadcast %cst_6 : f32 to vector<128x2xf32>
      %19 = arith.subf %18, %17 : vector<128x2xf32>
      %20 = math.exp %19 : vector<128x2xf32>
      %c0_7 = arith.constant 0 : index
      %c0_8 = arith.constant 0 : index
      %21 = vector.load %arg6[%c0_7, %c0_8] : memref<2x128xf32, #tpu.memory_space<vmem>>, vector<2x128xf32>
      %cst_9 = arith.constant dense<0.000000e+00> : vector<128x128xf32>
      %22 = tpu.matmul %20, %21, %cst_9 {dimension_numbers = #tpu.dot_dimension_numbers<[1], [0], [0], [1], [0, 0, 1, 1], [], []>} : vector<128x2xf32>, vector<2x128xf32>, vector<128x128xf32> -> vector<128x128xf32>
      %23 = arith.mulf %11, %22 : vector<128x128xf32>
      %24 = tpu.iota {dimensions = array<i32: 0>} : vector<8x128xi32>
      %c8_i32 = arith.constant 8 : i32
      %25 = arith.muli %arg0, %c8_i32 : i32
      %26 = vector.broadcast %25 : i32 to vector<8x128xi32>
      %27 = arith.addi %24, %26 : vector<8x128xi32>
      %c0_10 = arith.constant 0 : index
      %c0_11 = arith.constant 0 : index
      %28 = vector.load %arg5[%c0_10, %c0_11] : memref<1x128xi32, #tpu.memory_space<vmem>>, vector<1x128xi32>
      %29 = vector.broadcast %28 : vector<1x128xi32> to vector<8x128xi32>
      %30 = arith.cmpi eq, %27, %29 : vector<8x128xi32>
      %31 = arith.extui %30 : vector<8x128xi1> to vector<8x128xi32>
      %32 = arith.sitofp %31 : vector<8x128xi32> to vector<8x128xf32>
      %c0_12 = arith.constant 0 : index
      %c0_13 = arith.constant 0 : index
      %33 = vector.load %arg7[%c0_12, %c0_13] : memref<8x128xf32, #tpu.memory_space<vmem>>, vector<8x128xf32>
      %cst_14 = arith.constant dense<0.000000e+00> : vector<8x128xf32>
      %34 = tpu.matmul %32, %23, %cst_14 {dimension_numbers = #tpu.dot_dimension_numbers<[1], [0], [0], [1], [0, 0, 1, 1], [], []>} : vector<8x128xf32>, vector<128x128xf32>, vector<8x128xf32> -> vector<8x128xf32>
      %35 = arith.addf %33, %34 : vector<8x128xf32>
      %c0_15 = arith.constant 0 : index
      %c0_16 = arith.constant 0 : index
      %36 = vector.load %arg7[%c0_15, %c0_16] : memref<8x128xf32, #tpu.memory_space<vmem>>, vector<8x128xf32>
      tpu.vector_store %arg7[%c0_15, %c0_16], %35 {strides = array<i32>} : memref<8x128xf32, #tpu.memory_space<vmem>>, vector<8x128xf32>,
    } else {
    }
    %c0_i32_2 = arith.constant 0 : i32
    %8 = arith.cmpi eq, %arg1, %c0_i32_2 : i32
    %9 = arith.extui %8 : i1 to i32
    %c0_i32_3 = arith.constant 0 : i32
    %10 = arith.cmpi ne, %9, %c0_i32_3 : i32
    scf.if %10 {
      %c0 = arith.constant 0 : index
      %c0_4 = arith.constant 0 : index
      %11 = vector.load %arg7[%c0, %c0_4] : memref<8x128xf32, #tpu.memory_space<vmem>>, vector<8x128xf32>
      %12 = vector.extract_strided_slice %11 {offsets = [0, 64], sizes = [8, 2], strides = [1, 1]} : vector<8x128xf32> to vector<8x2xf32>
      %13 = tpu.reciprocal %12 : vector<8x2xf32> -> vector<8x2xf32>
      %c0_5 = arith.constant 0 : index
      %c0_6 = arith.constant 0 : index
      %14 = vector.load %arg6[%c0_5, %c0_6] : memref<2x128xf32, #tpu.memory_space<vmem>>, vector<2x128xf32>
      %cst = arith.constant dense<0.000000e+00> : vector<8x128xf32>
      %15 = tpu.matmul %13, %14, %cst {dimension_numbers = #tpu.dot_dimension_numbers<[1], [0], [0], [1], [0, 0, 1, 1], [], []>} : vector<8x2xf32>, vector<2x128xf32>, vector<8x128xf32> -> vector<8x128xf32>
      %16 = arith.mulf %11, %15 : vector<8x128xf32>
      %c0_7 = arith.constant 0 : index
      %c0_8 = arith.constant 0 : index
      %17 = vector.load %arg7[%c0_7, %c0_8] : memref<8x128xf32, #tpu.memory_space<vmem>>, vector<8x128xf32>
      tpu.vector_store %arg7[%c0_7, %c0_8], %16 {strides = array<i32>} : memref<8x128xf32, #tpu.memory_space<vmem>>, vector<8x128xf32>,
    } else {
    }
    return
  }
  func.func @transform_0(%arg0: i32, %arg1: i32, %arg2: memref<2xi32, #tpu.memory_space<smem>>, %arg3: memref<2xi32, #tpu.memory_space<smem>>) -> (i32, i32) {
    %0 = arith.index_cast %arg0 : i32 to index
    %1 = memref.load %arg2[%0] : memref<2xi32, #tpu.memory_space<smem>>
    %2 = arith.index_cast %arg0 : i32 to index
    %3 = memref.load %arg3[%2] : memref<2xi32, #tpu.memory_space<smem>>
    %c1_i32 = arith.constant 1 : i32
    %4 = arith.subi %3, %c1_i32 : i32
    %5 = arith.minsi %arg1, %4 : i32
    %6 = arith.addi %1, %5 : i32
    %c0_i32 = arith.constant 0 : i32
    %c0_i32_0 = arith.constant 0 : i32
    return %6, %c0_i32 : i32, i32
  }
  func.func @transform_1(%arg0: i32, %arg1: i32, %arg2: memref<2xi32, #tpu.memory_space<smem>>, %arg3: memref<2xi32, #tpu.memory_space<smem>>) -> (i32, i32) {
    %0 = arith.index_cast %arg0 : i32 to index
    %1 = memref.load %arg2[%0] : memref<2xi32, #tpu.memory_space<smem>>
    %2 = arith.index_cast %arg0 : i32 to index
    %3 = memref.load %arg3[%2] : memref<2xi32, #tpu.memory_space<smem>>
    %c1_i32 = arith.constant 1 : i32
    %4 = arith.subi %3, %c1_i32 : i32
    %5 = arith.minsi %arg1, %4 : i32
    %6 = arith.addi %1, %5 : i32
    %c0_i32 = arith.constant 0 : i32
    %c0_i32_0 = arith.constant 0 : i32
    return %c0_i32, %6 : i32, i32
  }
  func.func @transform_2(%arg0: i32, %arg1: i32, %arg2: memref<2xi32, #tpu.memory_space<smem>>, %arg3: memref<2xi32, #tpu.memory_space<smem>>) -> (i32, i32) {
    %c0_i32 = arith.constant 0 : i32
    %c0_i32_0 = arith.constant 0 : i32
    %c0_i32_1 = arith.constant 0 : i32
    return %c0_i32, %c0_i32_0 : i32, i32
  }
  func.func @transform_3(%arg0: i32, %arg1: i32, %arg2: memref<2xi32, #tpu.memory_space<smem>>, %arg3: memref<2xi32, #tpu.memory_space<smem>>) -> (i32, i32) {
    %c0_i32 = arith.constant 0 : i32
    %c0_i32_0 = arith.constant 0 : i32
    return %arg0, %c0_i32 : i32, i32
  }
}

</mosaic_0001>

<llo_original>
// kernel: tpu_custom_call.1
$region0: #{tpu_custom_call.1}
  #allocation0 [shape = 'u32[]', space=smem, size = 0x4, offset = 0x4, fixed_abs, tag = 'smem constant byte address 0x4 - core index']
  #allocation1 [shape = 'u32[72,128]{1,0:T(1,128)}', space=vmem, size = 0x9000, scoped, tag = 'internal scratch']
  #allocation2 [shape = 's32[1]{0}', space=sflag, size = 0x4, scoped, tag = 'scoped memory for tpu_custom_call.1']
  #allocation3 [shape = 'u8[512]{0}', space=smem, size = 0x200, scoped, tag = 'prefetched SMEM operand 0']
  #allocation4 [shape = 'u8[512]{0}', space=smem, size = 0x200, scoped, tag = 'prefetched SMEM operand 1']
  %s0 = inlined_call_operand.hbm [shape: s32[2], index: 0, kind: input, shape index: {}]
  %s1 = inlined_call_operand.hbm [shape: s32[2], index: 1, kind: input, shape index: {}]
  %s2 = inlined_call_operand.hbm [shape: f32[128,128], index: 2, kind: input, shape index: {}]
  %s3 = inlined_call_operand.vmem [shape: s32[1,128], index: 3, kind: input, shape index: {}]
  %s4 = inlined_call_operand.vmem [shape: f32[2,128], index: 4, kind: input, shape index: {}]
  %s5 = inlined_call_operand.hbm [shape: f32[16,128], index: 5, kind: output, shape index: {}]
  %s6 = sld [smem:[#allocation0]]
  $region61: #{tpu_custom_call.1} parent=0
    _
  %s8 = ssub.s32 1, %s6
  %s9 = scalar_select 0, %s8, %s6
  %s11 = sshll.u32 %s0, 4
  %s12 = int_to_ptr.hbm [resolvable:$true] %s11
  %14 = dma.hbm_to_smem %s12, 16, [#allocation3], [#allocation2]
  %s16 = sshll.u32 %s1, 4
  %s17 = int_to_ptr.hbm [resolvable:$true] %s16
  %19 = dma.hbm_to_smem %s17, 16, [#allocation4], [#allocation2]
  %21 = dma.done [#allocation2], 32
  %22 = sfence
  $region1: #{tpu_custom_call.1} parent=0
    #allocation5 [shape = 'u8[131072]{0}', space=vmem, size = 0x20000, scoped, tag = 'input window, operand 2']
    #allocation6 [shape = 's32[2]{0}', space=sflag, size = 0x8, scoped, tag = 'scoped memory for tpu_custom_call.1']
    #allocation7 [shape = 's32[2]{0}', space=sflag, size = 0x8, scoped, tag = 'scoped memory for tpu_custom_call.1']
    #allocation8 [shape = 'u8[8192]{0}', space=vmem, size = 0x2000, scoped, tag = 'output window, operand 0']
    %23 = vsyncpa [#allocation6], 0
    %s24 = scalar_lea.sflag [#allocation6], 1
    %25 = vsyncpa %s24, 0
    %26 = vsyncpa [#allocation7], 0
    %s27 = scalar_lea.sflag [#allocation7], 1
    %28 = vsyncpa %s27, 0
    loop: start=0, step=1, limit=4
    $region2: #{tpu_custom_call.1} parent=1 // loop_pre_header
      _
    $region3: #{tpu_custom_call.1} parent=1 // loop_header
      %s30 = sphi 0, %s34
      %p31 = scmp.ge.s32.totalorder %s30, 4
      %s37 = sphi 0, %s49
      %s38 = sphi 0, %s45
      %s39 = sphi 0, %s37
      %s40 = sphi 0, %s38
      %s41 = sphi 0, %s39
      %s42 = sphi 0, %s40
      %s64 = sphi 0, %s66
      %s67 = sphi 0, %s64
      %s68 = sphi 0, %s67
      %s84 = sphi 0, %s68
      %s102 = sphi 0, %s104
      %s105 = sphi 0, %s102
      %s106 = sphi 0, %s105
      %s122 = sphi 0, %s106
      %s126 = sphi 0, %s126
      %s128 = sphi 0, %s126
      %s129 = sphi 0, %s128
      %s143 = sphi 0, %s129
      %s149 = sphi 0, %s151
      %s152 = sphi 0, %s149
      %s153 = sphi 0, %s152
      %s169 = sphi 0, %s153
    $region4: #{tpu_custom_call.1} parent=1 // loop_header_branch
      %33 = sbr.rel (%p31) target = $region8
    $region5: #{tpu_custom_call.1} parent=1 // loop_body
      %s35 = ssub.s32 %s30, 1
      %s36 = ssub.s32 %s30, 2
      %s43 = sadd.s32 1, %s38
      %p44 = scmp.ge.s32.totalorder %s43, 1
      %s45 = scalar_select %p44, 0, %s43
      %s46 = sadd.s32 1, %s37
      %s47 = scalar_select %p44, %s46, %s37
      %p48 = scmp.ge.s32.totalorder %s47, 2
      %s49 = scalar_select %p48, 0, %s47
      %s50 = sld [smem:[#allocation3 + %s37]]
      %s51 = sld [smem:[#allocation4 + %s37]]
      %s52 = ssub.s32 %s51, 1
      %p53 = scmp.lt.s32.totalorder %s38, %s52
      %s54 = scalar_select %p53, %s38, %s52
      %s55 = sadd.s32 %s50, %s54
      %s56 = sld [smem:[#allocation3 + %s49]]
      %s57 = sld [smem:[#allocation4 + %s49]]
      %s58 = ssub.s32 %s57, 1
      %p59 = scmp.lt.s32.totalorder %s45, %s58
      %s60 = scalar_select %p59, %s45, %s58
      %s61 = sadd.s32 %s56, %s60
      %s62 = ssub.s32 %s55, %s61
      %p63 = scmp.eq.s32.totalorder %s62, 0
      %s65 = sadd.s32 %s64, 1
      %s66 = scalar_select %p63, %s64, %s65
      %p69 = pneg %p63
      %p70 = scmp.eq.s32.totalorder %s30, 1
      %p71 = por %p69, %p70
      %p72 = scmp.ne.s32.totalorder %s64, %s67
      %p73 = scmp.eq.s32.totalorder %s30, 0
      %p74 = por %p72, %p73
      %p75 = scmp.ne.s32.totalorder %s64, %s67
      %p76 = scmp.eq.s32.totalorder %s35, 1
      %p77 = por %p75, %p76
      %p78 = scmp.ne.s32.totalorder %s67, %s68
      %p79 = scmp.eq.s32.totalorder %s35, 0
      %p80 = por %p78, %p79
      %p81 = scmp.ne.s32.totalorder %s67, %s68
      %p82 = scmp.eq.s32.totalorder %s36, 1
      %p83 = por %p81, %p82
      %p85 = scmp.ne.s32.totalorder %s68, %s84
      %p86 = scmp.eq.s32.totalorder %s36, 0
      %p87 = por %p85, %p86
      %s88 = sld [smem:[#allocation3 + %s37]]
      %s89 = sld [smem:[#allocation4 + %s37]]
      %s90 = ssub.s32 %s89, 1
      %p91 = scmp.lt.s32.totalorder %s38, %s90
      %s92 = scalar_select %p91, %s38, %s90
      %s93 = sadd.s32 %s88, %s92
      %s94 = sld [smem:[#allocation3 + %s49]]
      %s95 = sld [smem:[#allocation4 + %s49]]
      %s96 = ssub.s32 %s95, 1
      %p97 = scmp.lt.s32.totalorder %s45, %s96
      %s98 = scalar_select %p97, %s45, %s96
      %s99 = sadd.s32 %s94, %s98
      %s100 = ssub.s32 %s93, %s99
      %p101 = scmp.eq.s32.totalorder %s100, 0
      %s103 = sadd.s32 %s102, 1
      %s104 = scalar_select %p101, %s102, %s103
      %p107 = pneg %p101
      %p108 = scmp.eq.s32.totalorder %s30, 1
      %p109 = por %p107, %p108
      %p110 = scmp.ne.s32.totalorder %s102, %s105
      %p111 = scmp.eq.s32.totalorder %s30, 0
      %p112 = por %p110, %p111
      %p113 = scmp.ne.s32.totalorder %s102, %s105
      %p114 = scmp.eq.s32.totalorder %s35, 1
      %p115 = por %p113, %p114
      %p116 = scmp.ne.s32.totalorder %s105, %s106
      %p117 = scmp.eq.s32.totalorder %s35, 0
      %p118 = por %p116, %p117
      %p119 = scmp.ne.s32.totalorder %s105, %s106
      %p120 = scmp.eq.s32.totalorder %s36, 1
      %p121 = por %p119, %p120
      %p123 = scmp.ne.s32.totalorder %s106, %s122
      %p124 = scmp.eq.s32.totalorder %s36, 0
      %p125 = por %p123, %p124
      %s127 = sadd.s32 %s126, 1
      %p130 = scmp.eq.s32.totalorder %s30, 1
      %p131 = scmp.ne.s32.totalorder %s126, %s128
      %p132 = scmp.eq.s32.totalorder %s30, 0
      %p133 = por %p131, %p132
      %p134 = scmp.ne.s32.totalorder %s126, %s128
      %p135 = scmp.eq.s32.totalorder %s35, 1
      %p136 = por %p134, %p135
      %p137 = scmp.ne.s32.totalorder %s128, %s129
      %p138 = scmp.eq.s32.totalorder %s35, 0
      %p139 = por %p137, %p138
      %p140 = scmp.ne.s32.totalorder %s128, %s129
      %p141 = scmp.eq.s32.totalorder %s36, 1
      %p142 = por %p140, %p141
      %p144 = scmp.ne.s32.totalorder %s129, %s143
      %p145 = scmp.eq.s32.totalorder %s36, 0
      %p146 = por %p144, %p145
      %s147 = ssub.s32 %s37, %s49
      %p148 = scmp.eq.s32.totalorder %s147, 0
      %s150 = sadd.s32 %s149, 1
      %s151 = scalar_select %p148, %s149, %s150
      %p154 = pneg %p148
      %p155 = scmp.eq.s32.totalorder %s30, 1
      %p156 = por %p154, %p155
      %p157 = scmp.ne.s32.totalorder %s149, %s152
      %p158 = scmp.eq.s32.totalorder %s30, 0
      %p159 = por %p157, %p158
      %p160 = scmp.ne.s32.totalorder %s149, %s152
      %p161 = scmp.eq.s32.totalorder %s35, 1
      %p162 = por %p160, %p161
      %p163 = scmp.ne.s32.totalorder %s152, %s153
      %p164 = scmp.eq.s32.totalorder %s35, 0
      %p165 = por %p163, %p164
      %p166 = scmp.ne.s32.totalorder %s152, %s153
      %p167 = scmp.eq.s32.totalorder %s36, 1
      %p168 = por %p166, %p167
      %p170 = scmp.ne.s32.totalorder %s153, %s169
      %p171 = scmp.eq.s32.totalorder %s36, 0
      %p172 = por %p170, %p171
      %p173 = scmp.le.s32.totalorder 1, %s30
      %p174 = scmp.lt.s32.totalorder %s30, 3
      %p175 = pnand %p173, %p174
      %p176 = pneg %p175
      // Predicated region
      $region9: #{tpu_custom_call.1} parent=5 // pred_check
        _
      $region10: #{tpu_custom_call.1} parent=5 // pred_check_branch
        %178 = sbr.rel (%p175) target = $region12
      $region11: #{tpu_custom_call.1} parent=5 // pred_region
        %s179 = ssub.s32 %s30, 1
        // Predicated region
        $region13: #{tpu_custom_call.1} parent=11 // pred_check
          %p180 = pneg %p139
        $region14: #{tpu_custom_call.1} parent=11 // pred_check_branch
          %182 = sbr.rel (%p180) target = $region16
        $region15: #{tpu_custom_call.1} parent=11 // pred_region
          _
        $region16: #{tpu_custom_call.1} parent=11 // pred_fallthru
          _
      $region12: #{tpu_custom_call.1} parent=5 // pred_fallthru
        _
      %p183 = scmp.lt.s32.totalorder %s30, 2
      // Predicated region
      $region17: #{tpu_custom_call.1} parent=5 // pred_check
        %p184 = pneg %p183
      $region18: #{tpu_custom_call.1} parent=5 // pred_check_branch
        %186 = sbr.rel (%p184) target = $region20
      $region19: #{tpu_custom_call.1} parent=5 // pred_region
        // Predicated region
        $region21: #{tpu_custom_call.1} parent=19 // pred_check
          %p187 = pneg %p74
        $region22: #{tpu_custom_call.1} parent=19 // pred_check_branch
          %189 = sbr.rel (%p187) target = $region24
        $region23: #{tpu_custom_call.1} parent=19 // pred_region
          %s190 = sand.u32 %s64, 1
          %s191 = scalar_lea.sflag [#allocation6], %s190
          %s192 = sand.u32 %s64, 1
          %s193 = smul.addr %s192, 128
          %s194 = scalar_lea.vmem [#allocation5], %s193
          %s195 = sld [smem:[#allocation3 + %s37]]
          %s196 = sld [smem:[#allocation4 + %s37]]
          %s197 = ssub.s32 %s196, 1
          %p198 = scmp.lt.s32.totalorder %s38, %s197
          %s199 = scalar_select %p198, %s38, %s197
          %s200 = sadd.s32 %s195, %s199
          %s201 = smul.u32 16, %s200
          %203 = vsyncadd %s191, 0
          %s204 = smul.addr %s201, 8
          %s205 = scalar_lea.hbm %s2, %s204
          %s206 = sshll.u32 %s205, 4
          %s207 = int_to_ptr.hbm [resolvable:$true] %s206
          %s208 = sshll.u32 %s194, 4
          %s209 = int_to_ptr.vmem [resolvable:$true] %s208
          %214 = dma.hbm_to_vmem [thread:$0]  %s207, 2048, %s209, %s191, 128, 128, 8
        $region24: #{tpu_custom_call.1} parent=19 // pred_fallthru
          _
        // Predicated region
        $region25: #{tpu_custom_call.1} parent=19 // pred_check
          %p215 = pneg %p112
        $region26: #{tpu_custom_call.1} parent=19 // pred_check_branch
          %217 = sbr.rel (%p215) target = $region28
        $region27: #{tpu_custom_call.1} parent=19 // pred_region
          %s218 = sld [smem:[#allocation3 + %s37]]
          %s219 = sld [smem:[#allocation4 + %s37]]
          %s220 = ssub.s32 %s219, 1
          %p221 = scmp.lt.s32.totalorder %s38, %s220
          %s222 = scalar_select %p221, %s38, %s220
          %s223 = sadd.s32 %s218, %s222
          %p224 = scmp.lt.s32.totalorder %s223, 0
          %s225 = scalar_select %p224, %s223, 0
          %s226 = scalar_lea.vmem %s3, %s225
          %s227 = sld [smem:[#allocation3 + %s37]]
          %s228 = sld [smem:[#allocation4 + %s37]]
          %s229 = ssub.s32 %s228, 1
          %p230 = scmp.lt.s32.totalorder %s38, %s229
          %s231 = scalar_select %p230, %s38, %s229
          %s232 = sadd.s32 %s227, %s231
        $region28: #{tpu_custom_call.1} parent=19 // pred_fallthru
          _
      $region20: #{tpu_custom_call.1} parent=5 // pred_fallthru
        _
      %p233 = scmp.le.s32.totalorder 1, %s30
      %p234 = scmp.lt.s32.totalorder %s30, 3
      %p235 = pnand %p233, %p234
      %p236 = pneg %p235
      // Predicated region
      $region29: #{tpu_custom_call.1} parent=5 // pred_check
        _
      $region30: #{tpu_custom_call.1} parent=5 // pred_check_branch
        %238 = sbr.rel (%p235) target = $region32
      $region31: #{tpu_custom_call.1} parent=5 // pred_region
        %s239 = ssub.s32 %s30, 1
        %s240 = sand.u32 %s67, 1
        %s241 = scalar_lea.sflag [#allocation6], %s240
        %s242 = sand.u32 %s67, 1
        %s243 = smul.addr %s242, 128
        %s244 = scalar_lea.vmem [#allocation5], %s243
        // Predicated region
        $region33: #{tpu_custom_call.1} parent=31 // pred_check
          %p245 = pneg %p80
        $region34: #{tpu_custom_call.1} parent=31 // pred_check_branch
          %247 = sbr.rel (%p245) target = $region36
        $region35: #{tpu_custom_call.1} parent=31 // pred_region
          %249 = dma.done %s241, 2048
        $region36: #{tpu_custom_call.1} parent=31 // pred_fallthru
          _
        %s250 = sand.u32 %s67, 1
        %s251 = scalar_lea.sflag [#allocation6], %s250
        %s252 = sand.u32 %s67, 1
        %s253 = smul.addr %s252, 128
        %s254 = scalar_lea.vmem [#allocation5], %s253
        %p255 = pneg %p80
        %p256 = pneg %p77
        %s257 = sld [smem:[#allocation3 + %s39]]
        %s258 = sld [smem:[#allocation4 + %s39]]
        %s259 = ssub.s32 %s258, 1
        %p260 = scmp.lt.s32.totalorder %s40, %s259
        %s261 = scalar_select %p260, %s40, %s259
        %s262 = sadd.s32 %s257, %s261
        %p263 = scmp.lt.s32.totalorder %s262, 0
        %s264 = scalar_select %p263, %s262, 0
        %s265 = scalar_lea.vmem %s3, %s264
        %p266 = pneg %p118
        %p267 = pneg %p115
        %p268 = pneg %p139
        %p269 = pneg %p136
        %p270 = pneg %p165
        %p271 = pneg %p162
        %s272 = sand.u32 %s152, 1
        %s273 = scalar_lea.sflag [#allocation7], %s272
        %s274 = sand.u32 %s152, 1
        %s275 = smul.addr %s274, 8
        %s276 = scalar_lea.vmem [#allocation8], %s275
        %s277 = sld [smem:[#allocation3 + %s39]]
        %s278 = sld [smem:[#allocation4 + %s39]]
        %s279 = ssub.s32 %s278, 1
        %p280 = scmp.lt.s32.totalorder %s40, %s279
        %s281 = scalar_select %p280, %s40, %s279
        %s282 = sadd.s32 %s277, %s281
        %s283 = smul.u32 16, %s282
        %s284 = sld [smem:[#allocation3 + %s39]]
        %s285 = sld [smem:[#allocation4 + %s39]]
        %s286 = ssub.s32 %s285, 1
        %p287 = scmp.lt.s32.totalorder %s40, %s286
        %s288 = scalar_select %p287, %s40, %s286
        %s289 = sadd.s32 %s284, %s288
        %p290 = scmp.lt.s32.totalorder %s289, 0
        %s291 = scalar_select %p290, %s289, 0
        %s292 = scalar_lea.vmem %s3, %s291
        %s293 = sld [smem:[#allocation3 + %s39]]
        %s294 = sld [smem:[#allocation4 + %s39]]
        %s295 = ssub.s32 %s294, 1
        %p296 = scmp.lt.s32.totalorder %s40, %s295
        %s297 = scalar_select %p296, %s40, %s295
        %s298 = sadd.s32 %s293, %s297
        %p299 = scmp.eq.s32.totalorder %s40, 0
        // Predicated region
        $region37: #{tpu_custom_call.1} parent=31 // pred_check
          %p300 = pneg %p299
        $region38: #{tpu_custom_call.1} parent=31 // pred_check_branch
          %302 = sbr.rel (%p300) target = $region40
        $region39: #{tpu_custom_call.1} parent=31 // pred_region
          %303 = vst [vmem:[%s276] sm:$0xff] 0.0
        $region40: #{tpu_custom_call.1} parent=31 // pred_fallthru
          _
        %s304 = sld [smem:[#allocation4 + %s39]]
        %p305 = scmp.lt.s32.totalorder %s40, %s304
        // Predicated region
        $region41: #{tpu_custom_call.1} parent=31 // pred_check
          %p306 = pneg %p305
        $region42: #{tpu_custom_call.1} parent=31 // pred_check_branch
          %308 = sbr.rel (%p306) target = $region44
        $region43: #{tpu_custom_call.1} parent=31 // pred_region
          %v309 = vld [vmem:[%s244] sm:$0xff]
          %v310 = vld [vmem:[%s244 + $0x8] sm:$0xff]
          %v311 = vld [vmem:[%s244 + $0x10] sm:$0xff]
          %v312 = vld [vmem:[%s244 + $0x18] sm:$0xff]
          %v313 = vld [vmem:[%s244 + $0x20] sm:$0xff]
          %v314 = vld [vmem:[%s244 + $0x28] sm:$0xff]
          %v315 = vld [vmem:[%s244 + $0x30] sm:$0xff]
          %v316 = vld [vmem:[%s244 + $0x38] sm:$0xff]
          %v317 = vld [vmem:[%s244 + $0x40] sm:$0xff]
          %v318 = vld [vmem:[%s244 + $0x48] sm:$0xff]
          %v319 = vld [vmem:[%s244 + $0x50] sm:$0xff]
          %v320 = vld [vmem:[%s244 + $0x58] sm:$0xff]
          %v321 = vld [vmem:[%s244 + $0x60] sm:$0xff]
          %v322 = vld [vmem:[%s244 + $0x68] sm:$0xff]
          %v323 = vld [vmem:[%s244 + $0x70] sm:$0xff]
          %v324 = vld [vmem:[%s244 + $0x78] sm:$0xff]
          %vm325 = vcmp.gt.f32.partialorder %v309, 0.0
          %vm326 = vcmp.gt.f32.partialorder %v310, 0.0
          %vm327 = vcmp.gt.f32.partialorder %v311, 0.0
          %vm328 = vcmp.gt.f32.partialorder %v312, 0.0
          %vm329 = vcmp.gt.f32.partialorder %v313, 0.0
          %vm330 = vcmp.gt.f32.partialorder %v314, 0.0
          %vm331 = vcmp.gt.f32.partialorder %v315, 0.0
          %vm332 = vcmp.gt.f32.partialorder %v316, 0.0
          %vm333 = vcmp.gt.f32.partialorder %v317, 0.0
          %vm334 = vcmp.gt.f32.partialorder %v318, 0.0
          %vm335 = vcmp.gt.f32.partialorder %v319, 0.0
          %vm336 = vcmp.gt.f32.partialorder %v320, 0.0
          %vm337 = vcmp.gt.f32.partialorder %v321, 0.0
          %vm338 = vcmp.gt.f32.partialorder %v322, 0.0
          %vm339 = vcmp.gt.f32.partialorder %v323, 0.0
          %vm340 = vcmp.gt.f32.partialorder %v324, 0.0
          %v341 = vmul.f32 %v309, 0.2
          %v342 = vmul.f32 %v310, 0.2
          %v343 = vmul.f32 %v311, 0.2
          %v344 = vmul.f32 %v312, 0.2
          %v345 = vmul.f32 %v313, 0.2
          %v346 = vmul.f32 %v314, 0.2
          %v347 = vmul.f32 %v315, 0.2
          %v348 = vmul.f32 %v316, 0.2
          %v349 = vmul.f32 %v317, 0.2
          %v350 = vmul.f32 %v318, 0.2
          %v351 = vmul.f32 %v319, 0.2
          %v352 = vmul.f32 %v320, 0.2
          %v353 = vmul.f32 %v321, 0.2
          %v354 = vmul.f32 %v322, 0.2
          %v355 = vmul.f32 %v323, 0.2
          %v356 = vmul.f32 %v324, 0.2
          %v357 = vsel %vm325, %v309, %v341
          %v358 = vsel %vm326, %v310, %v342
          %v359 = vsel %vm327, %v311, %v343
          %v360 = vsel %vm328, %v312, %v344
          %v361 = vsel %vm329, %v313, %v345
          %v362 = vsel %vm330, %v314, %v346
          %v363 = vsel %vm331, %v315, %v347
          %v364 = vsel %vm332, %v316, %v348
          %v365 = vsel %vm333, %v317, %v349
          %v366 = vsel %vm334, %v318, %v350
          %v367 = vsel %vm335, %v319, %v351
          %v368 = vsel %vm336, %v320, %v352
          %v369 = vsel %vm337, %v321, %v353
          %v370 = vsel %vm338, %v322, %v354
          %v371 = vsel %vm339, %v323, %v355
          %v372 = vsel %vm340, %v324, %v356
          %v373 = vsub.f32 0.0, %v357
          %v374 = vsub.f32 0.0, %v358
          %v375 = vsub.f32 0.0, %v359
          %v376 = vsub.f32 0.0, %v360
          %v377 = vsub.f32 0.0, %v361
          %v378 = vsub.f32 0.0, %v362
          %v379 = vsub.f32 0.0, %v363
          %v380 = vsub.f32 0.0, %v364
          %v381 = vsub.f32 0.0, %v365
          %v382 = vsub.f32 0.0, %v366
          %v383 = vsub.f32 0.0, %v367
          %v384 = vsub.f32 0.0, %v368
          %v385 = vsub.f32 0.0, %v369
          %v386 = vsub.f32 0.0, %v370
          %v387 = vsub.f32 0.0, %v371
          %v388 = vsub.f32 0.0, %v372
          %v389 = vmul.f32 %v373, 1.442695
          %v390 = vpow.pop %v389
          %v391 = vmul.f32 %v374, 1.442695
          %v392 = vpow.pop %v391
          %v393 = vmul.f32 %v375, 1.442695
          %v394 = vpow.pop %v393
          %v395 = vmul.f32 %v376, 1.442695
          %v396 = vpow.pop %v395
          %v397 = vmul.f32 %v377, 1.442695
          %v398 = vpow.pop %v397
          %v399 = vmul.f32 %v378, 1.442695
          %v400 = vpow.pop %v399
          %v401 = vmul.f32 %v379, 1.442695
          %v402 = vpow.pop %v401
          %v403 = vmul.f32 %v380, 1.442695
          %v404 = vpow.pop %v403
          %v405 = vmul.f32 %v381, 1.442695
          %v406 = vpow.pop %v405
          %v407 = vmul.f32 %v382, 1.442695
          %v408 = vpow.pop %v407
          %v409 = vmul.f32 %v383, 1.442695
          %v410 = vpow.pop %v409
          %v411 = vmul.f32 %v384, 1.442695
          %v412 = vpow.pop %v411
          %v413 = vmul.f32 %v385, 1.442695
          %v414 = vpow.pop %v413
          %v415 = vmul.f32 %v386, 1.442695
          %v416 = vpow.pop %v415
          %v417 = vmul.f32 %v387, 1.442695
          %v418 = vpow.pop %v417
          %v419 = vmul.f32 %v388, 1.442695
          %v420 = vpow.pop %v419
          %v421 = vld [vmem:[%s4] sm:$0x3]
          %438 = vrot.lane.b32.xlu0 %v390, 62
          %v439 = vpop.permute.xlu0 %438
          %440 = vrot.lane.b32.xlu0 %v392, 62
          %v441 = vpop.permute.xlu0 %440
          %442 = vrot.lane.b32.xlu0 %v394, 62
          %v443 = vpop.permute.xlu0 %442
          %444 = vrot.lane.b32.xlu0 %v396, 62
          %v445 = vpop.permute.xlu0 %444
          %446 = vrot.lane.b32.xlu0 %v398, 62
          %v447 = vpop.permute.xlu0 %446
          %448 = vrot.lane.b32.xlu0 %v400, 62
          %v449 = vpop.permute.xlu0 %448
          %450 = vrot.lane.b32.xlu0 %v402, 62
          %v451 = vpop.permute.xlu0 %450
          %452 = vrot.lane.b32.xlu0 %v404, 62
          %v453 = vpop.permute.xlu0 %452
          %454 = vrot.lane.b32.xlu0 %v406, 62
          %v455 = vpop.permute.xlu0 %454
          %456 = vrot.lane.b32.xlu0 %v408, 62
          %v457 = vpop.permute.xlu0 %456
          %458 = vrot.lane.b32.xlu0 %v410, 62
          %v459 = vpop.permute.xlu0 %458
          %460 = vrot.lane.b32.xlu0 %v412, 62
          %v461 = vpop.permute.xlu0 %460
          %462 = vrot.lane.b32.xlu0 %v414, 62
          %v463 = vpop.permute.xlu0 %462
          %464 = vrot.lane.b32.xlu0 %v416, 62
          %v465 = vpop.permute.xlu0 %464
          %466 = vrot.lane.b32.xlu0 %v418, 62
          %v467 = vpop.permute.xlu0 %466
          %468 = vrot.lane.b32.xlu0 %v420, 62
          %v469 = vpop.permute.xlu0 %468
          %vm470 = vcmask 15360
          %v471 = vsel %vm470, %v439, 0
          %v473 = vsel %vm470, %v441, 0
          %v475 = vsel %vm470, %v443, 0
          %v477 = vsel %vm470, %v445, 0
          %v479 = vsel %vm470, %v447, 0
          %v481 = vsel %vm470, %v449, 0
          %v483 = vsel %vm470, %v451, 0
          %v485 = vsel %vm470, %v453, 0
          %v487 = vsel %vm470, %v455, 0
          %v489 = vsel %vm470, %v457, 0
          %v491 = vsel %vm470, %v459, 0
          %v493 = vsel %vm470, %v461, 0
          %v495 = vsel %vm470, %v463, 0
          %v497 = vsel %vm470, %v465, 0
          %v499 = vsel %vm470, %v467, 0
          %v501 = vsel %vm470, %v469, 0
          %vm503 = vcmask 1041408
          %v505 = vsel %vm503, %v421, 0
          %507 = vmatpush.msra.mxu0 0.0
          %508 = vmatpush.msra.mxu0 0.0
          %509 = vmatpush.msra.mxu0 0.0
          %510 = vmatpush.msra.mxu0 0.0
          %511 = vmatpush.msra.mxu0 0.0
          %512 = vmatpush.msra.mxu0 0.0
          %513 = vmatpush.msra.mxu0 0.0
          %514 = vmatpush.msra.mxu0 0.0
          %515 = vmatpush.msra.mxu0 0.0
          %516 = vmatpush.msra.mxu0 0.0
          %517 = vmatpush.msra.mxu0 0.0
          %518 = vmatpush.msra.mxu0 0.0
          %519 = vmatpush.msra.mxu0 0.0
          %520 = vmatpush.msra.mxu0 0.0
          %521 = vmatpush.msra.mxu0 0.0
          %522 = vmatpush.msra.mxu0 %v505
          %523 = vmatmul.f32.gmra.mxu0 %v471
          %v524 = vpop.f32.mrf.mxu0
          %v525 = vadd.f32 0.0, %v524
          %526 = vmatmul.f32.gmra.mxu0 %v473
          %v527 = vpop.f32.mrf.mxu0
          %v528 = vadd.f32 0.0, %v527
          %529 = vmatmul.f32.gmra.mxu0 %v475
          %v530 = vpop.f32.mrf.mxu0
          %v531 = vadd.f32 0.0, %v530
          %532 = vmatmul.f32.gmra.mxu0 %v477
          %v533 = vpop.f32.mrf.mxu0
          %v534 = vadd.f32 0.0, %v533
          %535 = vmatmul.f32.gmra.mxu0 %v479
          %v536 = vpop.f32.mrf.mxu0
          %v537 = vadd.f32 0.0, %v536
          %538 = vmatmul.f32.gmra.mxu0 %v481
          %v539 = vpop.f32.mrf.mxu0
          %v540 = vadd.f32 0.0, %v539
          %541 = vmatmul.f32.gmra.mxu0 %v483
          %v542 = vpop.f32.mrf.mxu0
          %v543 = vadd.f32 0.0, %v542
          %544 = vmatmul.f32.gmra.mxu0 %v485
          %v545 = vpop.f32.mrf.mxu0
          %v546 = vadd.f32 0.0, %v545
          %547 = vmatmul.f32.gmra.mxu0 %v487
          %v548 = vpop.f32.mrf.mxu0
          %v549 = vadd.f32 0.0, %v548
          %550 = vmatmul.f32.gmra.mxu0 %v489
          %v551 = vpop.f32.mrf.mxu0
          %v552 = vadd.f32 0.0, %v551
          %553 = vmatmul.f32.gmra.mxu0 %v491
          %v554 = vpop.f32.mrf.mxu0
          %v555 = vadd.f32 0.0, %v554
          %556 = vmatmul.f32.gmra.mxu0 %v493
          %v557 = vpop.f32.mrf.mxu0
          %v558 = vadd.f32 0.0, %v557
          %559 = vmatmul.f32.gmra.mxu0 %v495
          %v560 = vpop.f32.mrf.mxu0
          %v561 = vadd.f32 0.0, %v560
          %562 = vmatmul.f32.gmra.mxu0 %v497
          %v563 = vpop.f32.mrf.mxu0
          %v564 = vadd.f32 0.0, %v563
          %565 = vmatmul.f32.gmra.mxu0 %v499
          %v566 = vpop.f32.mrf.mxu0
          %v567 = vadd.f32 0.0, %v566
          %568 = vmatmul.f32.gmra.mxu0 %v501
          %v569 = vpop.f32.mrf.mxu0
          %v570 = vadd.f32 0.0, %v569
          %571 = vdwg.mxu0
          %v572 = vmul.f32 %v309, %v525
          %v573 = vmul.f32 %v310, %v528
          %v574 = vmul.f32 %v311, %v531
          %v575 = vmul.f32 %v312, %v534
          %v576 = vmul.f32 %v313, %v537
          %v577 = vmul.f32 %v314, %v540
          %v578 = vmul.f32 %v315, %v543
          %v579 = vmul.f32 %v316, %v546
          %v580 = vmul.f32 %v317, %v549
          %v581 = vmul.f32 %v318, %v552
          %v582 = vmul.f32 %v319, %v555
          %v583 = vmul.f32 %v320, %v558
          %v584 = vmul.f32 %v321, %v561
          %v585 = vmul.f32 %v322, %v564
          %v586 = vmul.f32 %v323, %v567
          %v587 = vmul.f32 %v324, %v570
          %v588 = vlaneseq
          %v589 = vshrl.u32 %v588, 7
          %s590 = smul.u32 %s39, 8
          %v591 = vstv %s590
          %v592 = vadd.s32 %v589, %v591
          %v593 = vld [vmem:[%s292] sm:$0x1]
          %v594 = vperm.slane %v593, 0
          %vm595 = vcmp.eq.s32.totalorder %v592, %v594
          %v596 = vsel %vm595, 1, 0
          %v597 = vcvt.s32.f32 %v596
          %v598 = vld [vmem:[%s276] sm:$0xff]
          %599 = vmatpush.msra.mxu0 %v587
          %600 = vmatpush.msra.mxu0 %v586
          %601 = vmatpush.msra.mxu0 %v585
          %602 = vmatpush.msra.mxu0 %v584
          %603 = vmatpush.msra.mxu0 %v583
          %604 = vmatpush.msra.mxu0 %v582
          %605 = vmatpush.msra.mxu0 %v581
          %606 = vmatpush.msra.mxu0 %v580
          %607 = vmatpush.msra.mxu0 %v579
          %608 = vmatpush.msra.mxu0 %v578
          %609 = vmatpush.msra.mxu0 %v577
          %610 = vmatpush.msra.mxu0 %v576
          %611 = vmatpush.msra.mxu0 %v575
          %612 = vmatpush.msra.mxu0 %v574
          %613 = vmatpush.msra.mxu0 %v573
          %614 = vmatpush.msra.mxu0 %v572
          %615 = vmatmul.f32.gmra.mxu0 %v597
          %v616 = vpop.f32.mrf.mxu0
          %v617 = vadd.f32 0.0, %v616
          %618 = vdwg.mxu0
          %v619 = vadd.f32 %v598, %v617
          %620 = vst [vmem:[%s276] sm:$0xff] %v619
        $region44: #{tpu_custom_call.1} parent=31 // pred_fallthru
          _
        // Predicated region
        $region45: #{tpu_custom_call.1} parent=31 // pred_check
          %p621 = pneg %p299
        $region46: #{tpu_custom_call.1} parent=31 // pred_check_branch
          %623 = sbr.rel (%p621) target = $region48
        $region47: #{tpu_custom_call.1} parent=31 // pred_region
          %v624 = vld [vmem:[%s276] sm:$0xff]
          %v625 = vrcp.pop %v624
          %v626 = vmul.f32 %v624, %v625
          %v627 = vsub.f32 1.0, %v626
          %v628 = vmul.f32 %v625, %v627
          %v629 = vadd.f32 %v625, %v628
          %vm630 = vweird.f32 %v624
          %vm631 = vweird.f32 %v625
          %vm632 = vmor %vm630, %vm631
          %v633 = vsel %vm632, %v625, %v629
          %v634 = vand.u32 2147483647, %v624
          %vm635 = vcmp.eq.f32.partialorder %v634, 8.507059e+37
          %v636 = vand.u32 %v624, 2147483648
          %v637 = vor.u32 1.1754944e-38, %v636
          %v638 = vsel %vm635, %v637, %v633
          %v639 = vld [vmem:[%s4] sm:$0x3]
          %641 = vrot.lane.b32.xlu0 %v638, 64
          %v642 = vpop.permute.xlu0 %641
          %vm643 = vcmask 15360
          %v644 = vsel %vm643, %v642, 0
          %vm646 = vcmask 1041408
          %v648 = vsel %vm646, %v639, 0
          %650 = vmatpush.msra.mxu0 0.0
          %651 = vmatpush.msra.mxu0 0.0
          %652 = vmatpush.msra.mxu0 0.0
          %653 = vmatpush.msra.mxu0 0.0
          %654 = vmatpush.msra.mxu0 0.0
          %655 = vmatpush.msra.mxu0 0.0
          %656 = vmatpush.msra.mxu0 0.0
          %657 = vmatpush.msra.mxu0 0.0
          %658 = vmatpush.msra.mxu0 0.0
          %659 = vmatpush.msra.mxu0 0.0
          %660 = vmatpush.msra.mxu0 0.0
          %661 = vmatpush.msra.mxu0 0.0
          %662 = vmatpush.msra.mxu0 0.0
          %663 = vmatpush.msra.mxu0 0.0
          %664 = vmatpush.msra.mxu0 0.0
          %665 = vmatpush.msra.mxu0 %v648
          %666 = vmatmul.f32.gmra.mxu0 %v644
          %v667 = vpop.f32.mrf.mxu0
          %v668 = vadd.f32 0.0, %v667
          %669 = vdwg.mxu0
          %v670 = vmul.f32 %v624, %v668
          %671 = vst [vmem:[%s276] sm:$0xff] %v670
        $region48: #{tpu_custom_call.1} parent=31 // pred_fallthru
          _
        %s672 = sand.u32 %s152, 1
        %s673 = scalar_lea.sflag [#allocation7], %s672
        %s674 = sand.u32 %s152, 1
        %s675 = smul.addr %s674, 8
        %s676 = scalar_lea.vmem [#allocation8], %s675
        // Predicated region
        $region49: #{tpu_custom_call.1} parent=31 // pred_check
          %p677 = pneg %p162
        $region50: #{tpu_custom_call.1} parent=31 // pred_check_branch
          %679 = sbr.rel (%p677) target = $region52
        $region51: #{tpu_custom_call.1} parent=31 // pred_region
          %681 = vsyncadd %s673, 0
          %s682 = smul.addr %s39, 8
          %s683 = scalar_lea.hbm %s5, %s682
          %s685 = sshll.u32 %s676, 4
          %s686 = int_to_ptr.vmem [resolvable:$true] %s685
          %s687 = sshll.u32 %s683, 4
          %s688 = int_to_ptr.hbm [resolvable:$true] %s687
          %690 = dma.vmem_to_hbm [thread:$0]  %s686, 128, %s688, %s673
        $region52: #{tpu_custom_call.1} parent=31 // pred_fallthru
          _
      $region32: #{tpu_custom_call.1} parent=5 // pred_fallthru
        _
      %p691 = scmp.le.s32.totalorder 2, %s30
      // Predicated region
      $region53: #{tpu_custom_call.1} parent=5 // pred_check
        %p692 = pneg %p691
      $region54: #{tpu_custom_call.1} parent=5 // pred_check_branch
        %694 = sbr.rel (%p692) target = $region56
      $region55: #{tpu_custom_call.1} parent=5 // pred_region
        %s695 = ssub.s32 %s30, 2
        // Predicated region
        $region57: #{tpu_custom_call.1} parent=55 // pred_check
          %p696 = pneg %p168
        $region58: #{tpu_custom_call.1} parent=55 // pred_check_branch
          %698 = sbr.rel (%p696) target = $region60
        $region59: #{tpu_custom_call.1} parent=55 // pred_region
          %s699 = sand.u32 %s153, 1
          %s700 = scalar_lea.sflag [#allocation7], %s699
          %s701 = sand.u32 %s153, 1
          %s702 = smul.addr %s701, 8
          %s703 = scalar_lea.vmem [#allocation8], %s702
          %705 = dma.done %s700, 128
        $region60: #{tpu_custom_call.1} parent=55 // pred_fallthru
          _
      $region56: #{tpu_custom_call.1} parent=5 // pred_fallthru
        _
    $region6: #{tpu_custom_call.1} parent=1 // loop_footer
      %s34 = sadd.s32 1, %s30
    $region7: #{tpu_custom_call.1} parent=1 // loop_footer_branch
      %29 = sbr.rel target = $region3
    $region8: #{tpu_custom_call.1} parent=1 // loop_exit
      _
    %706 = vsyncpa [#allocation6], 1
    %s707 = scalar_lea.sflag [#allocation6], 1
    %708 = vsyncpa %s707, 1
    %709 = vsyncpa [#allocation7], 1
    %s710 = scalar_lea.sflag [#allocation7], 1
    %711 = vsyncpa %s710, 1

</llo_original>
